<compile_context>
chip_gen: v5e
topology: v5e:2x2
jax: 0.10.0
libtpu: 0.0.40
codegen_flags: <defaults>
</compile_context>

<pallas_src>
import functools
import math

import jax
import jax.numpy as jnp
from jax import lax
from jax.experimental import pallas as pl
from jax.experimental.pallas import tpu as pltpu


_VMEM_BUDGET_BYTES = 40 * 1024 * 1024     # target for the tile/VMEM estimate
_VMEM_LIMIT_BYTES = 48 * 1024 * 1024      # scoped-VMEM cap passed to Mosaic


def _round_up(a, b):
    return (a + b - 1) // b * b


def _gelu_exact_f32(h):
    # exact GELU (matches PyTorch nn.GELU default): 0.5*x*(1+erf(x/sqrt(2)))
    return 0.5 * h * (1.0 + lax.erf(h * (1.0 / math.sqrt(2.0))))


def _cmlp_kernel(x_ref, w1t_ref, b1_ref, w2t_ref, b2_ref, o_ref, *, hid_chunk):
    # x_ref: (1, Cin, T) -- channels on sublanes, pixels on lanes.
    x = x_ref[0]                                   # native dtype (bf16 stays bf16)
    mxu_dtype = x.dtype
    T = x.shape[1]
    Chid = w1t_ref.shape[0]
    Cout = w2t_ref.shape[0]

    # NOTE: for degenerate channel counts (demo-size Cin<=32) the MXU pads the
    # contraction to 128/256; the kernel is HBM-bound there anyway, so a
    # separate VPU broadcast-FMA path is not worth the extra code path.
    def fc_chunk(w1c, b1c, w2c):
        # fc1 (1x1 conv == per-pixel channel matmul), f32 accumulation on MXU.
        h = jnp.dot(w1c, x, preferred_element_type=jnp.float32) + b1c
        h = _gelu_exact_f32(h)
        # fc2 partial product; feed the MXU in the activation dtype again.
        return jnp.dot(w2c, h.astype(mxu_dtype), preferred_element_type=jnp.float32)

    if hid_chunk is None:
        y = fc_chunk(w1t_ref[...], b1_ref[...], w2t_ref[...])
    else:
        num_chunks = Chid // hid_chunk

        def body(k, acc):
            s = pl.multiple_of(k * hid_chunk, hid_chunk)
            w1c = w1t_ref[pl.ds(s, hid_chunk), :]
            b1c = b1_ref[pl.ds(s, hid_chunk), :]
            w2c = w2t_ref[:, pl.ds(s, hid_chunk)]
            return acc + fc_chunk(w1c, b1c, w2c)

        y = lax.fori_loop(0, num_chunks, body, jnp.zeros((Cout, T), jnp.float32))

    y = y + b2_ref[...]
    o_ref[0] = y.astype(o_ref.dtype)


def _pick_hid_chunk(Chid):
    if Chid >= 1024:
        for c in (512, 256, 128):
            if Chid % c == 0:
                return c
    return None


def _vmem_per_step_bytes(tile_hw, Cin, Chid, Cout, itemsize, hid_chunk, w_buffers):
    chid_live = Chid if hid_chunk is None else hid_chunk
    x_buf = 2 * Cin * tile_hw * itemsize                 # double-buffered input tile
    o_buf = 2 * Cout * tile_hw * itemsize                # double-buffered output tile
    h_buf = chid_live * tile_hw * 4                      # live f32 hidden intermediate
    acc = 0 if hid_chunk is None else Cout * tile_hw * 4
    w_buf = w_buffers * ((Chid * Cin + Cout * Chid) * itemsize + (Chid + Cout) * 4)
    return x_buf + o_buf + h_buf + acc + w_buf


def _pick_tile_hw(HW, Cin, Chid, Cout, itemsize, hid_chunk, w_buffers):
    # Lane-dense tiles, capped at 1024 (measured within ~1% of 2048) and shrunk
    # further if the rough per-step VMEM estimate would blow the budget.
    tile = min(1024, _round_up(max(HW, 1), 128))
    while tile > 128 and _vmem_per_step_bytes(
            tile, Cin, Chid, Cout, itemsize, hid_chunk, w_buffers) > _VMEM_BUDGET_BYTES:
        tile = _round_up(tile // 2, 128)
    return tile


def _resident_spec(shape, single_buffer):
    index_map = lambda n, j: (0, 0)
    if single_buffer:
        try:
            return pl.BlockSpec(shape, index_map, pipeline_mode=pl.Buffered(1))
        except (AttributeError, TypeError):
            pass
    return pl.BlockSpec(shape, index_map)


@jax.jit
def cmlp_forward(x_nchw, w1, b1, w2, b2):
    """CMlp forward.

    x_nchw: (N, Cin, H, W)
    w1: (Cin, Chid), b1: (Chid,)   -- fc1 (1x1 conv)
    w2: (Chid, Cout), b2: (Cout,)  -- fc2 (1x1 conv)
    """
    N, Cin, H, W = x_nchw.shape
    Chid = w1.shape[1]
    Cout = w2.shape[1]
    HW = H * W

    # Stay in NCHW: pixels on the lane axis (free metadata reshape, no copy).
    x3d = x_nchw.reshape(N, Cin, HW)

    # Weights feed the MXU in the activation dtype; biases in f32 for VPU math.
    w_dtype = x_nchw.dtype
    w1t = jnp.transpose(w1).astype(w_dtype)              # (Chid, Cin)
    w2t = jnp.transpose(w2).astype(w_dtype)              # (Cout, Chid)
    b1c = b1.reshape(Chid, 1).astype(jnp.float32)
    b2c = b2.reshape(Cout, 1).astype(jnp.float32)

    itemsize = jnp.dtype(w_dtype).itemsize
    hid_chunk = _pick_hid_chunk(Chid)

    # Single-buffer the resident weights only when double-buffering them would
    # actually cost meaningful VMEM (ViT-scale channel counts).
    weight_bytes = (Chid * Cin + Cout * Chid) * itemsize
    single_w = weight_bytes > (2 * 1024 * 1024)
    w_buffers = 1 if single_w else 2

    tile_hw = _pick_tile_hw(HW, Cin, Chid, Cout, itemsize, hid_chunk, w_buffers)
    grid = (N, pl.cdiv(HW, tile_hw))     # partial last tile -> masked stores, no pad

    kernel = functools.partial(_cmlp_kernel, hid_chunk=hid_chunk)

    out3d = pl.pallas_call(
        kernel,
        out_shape=jax.ShapeDtypeStruct((N, Cout, HW), x_nchw.dtype),
        grid_spec=pltpu.PrefetchScalarGridSpec(
            num_scalar_prefetch=0,
            grid=grid,
            in_specs=[
                pl.BlockSpec((1, Cin, tile_hw), lambda n, j: (n, 0, j)),   # x slab (lane-dense)
                _resident_spec((Chid, Cin), single_w),                     # W1^T (resident)
                _resident_spec((Chid, 1), single_w),                       # b1 column
                _resident_spec((Cout, Chid), single_w),                    # W2^T (resident)
                _resident_spec((Cout, 1), single_w),                       # b2 column
            ],
            out_specs=pl.BlockSpec((1, Cout, tile_hw), lambda n, j: (n, 0, j)),
        ),
        compiler_params=pltpu.CompilerParams(
            dimension_semantics=("parallel", "parallel"),
            vmem_limit_bytes=_VMEM_LIMIT_BYTES,
        ),
    )(x3d, w1t, b1c, w2t, b2c)

    return out3d.reshape(N, Cout, H, W)


def _reference(x_nchw, w1, b1, w2, b2):
    # Pure-JAX reference for the same math (1x1 convs as channel matmuls).
    x2d = jnp.transpose(x_nchw, (0, 2, 3, 1)).astype(jnp.float32)
    h = x2d @ w1 + b1
    h = 0.5 * h * (1.0 + lax.erf(h / math.sqrt(2.0)))
    y = h @ w2 + b2
    return jnp.transpose(y, (0, 3, 1, 2)).astype(x_nchw.dtype)


if __name__ == "__main__":
    key = jax.random.PRNGKey(0)
    N, Cin, H, W = 2, 4, 16, 16           # small NCHW input
    hidden = 32                           # hidden_features
    Cout = Cin                            # out_features defaults to in_features

    kx, k1, k2, k3, k4 = jax.random.split(key, 5)
    x = jax.random.normal(kx, (N, Cin, H, W), dtype=jnp.float32)

    # Deterministic param init (Conv2d(k=1) weight (Cout,Cin,1,1) == matrix (Cin,Cout) here).
    bound1 = 1.0 / math.sqrt(Cin)
    bound2 = 1.0 / math.sqrt(hidden)
    w1 = jax.random.uniform(k1, (Cin, hidden), jnp.float32, -bound1, bound1)
    b1 = jax.random.uniform(k2, (hidden,), jnp.float32, -bound1, bound1)
    w2 = jax.random.uniform(k3, (hidden, Cout), jnp.float32, -bound2, bound2)
    b2 = jax.random.uniform(k4, (Cout,), jnp.float32, -bound2, bound2)

    out = cmlp_forward(x, w1, b1, w2, b2)
    jax.block_until_ready(out)

    ref = _reference(x, w1, b1, w2, b2)
    assert out.shape == (N, Cout, H, W)
    assert jnp.allclose(out, ref, atol=1e-5, rtol=1e-5)

    print("KERNEL_OK")
</pallas_src>

<mosaic_0001>
module attributes {stable_mosaic.version = 11 : i64} {
  func.func @_cmlp_kernel(%arg0: i32, %arg1: i32, %arg2: memref<1x4x256xf32, #tpu.memory_space<vmem>>, %arg3: memref<32x4xf32, #tpu.memory_space<vmem>>, %arg4: memref<32x1xf32, #tpu.memory_space<vmem>>, %arg5: memref<4x32xf32, #tpu.memory_space<vmem>>, %arg6: memref<4x1xf32, #tpu.memory_space<vmem>>, %arg7: memref<1x4x256xf32, #tpu.memory_space<vmem>>) attributes {dimension_semantics = [#tpu.dimension_semantics<parallel>, #tpu.dimension_semantics<parallel>], iteration_bounds = array<i64: 2, 1>, scalar_prefetch = 0 : i64, scratch_operands = 0 : i64, tpu.core_type = #tpu.core_type<tc>, window_params = [{transform_indices = @transform_0, window_bounds = array<i64: 1, 4, 256>}, {pipeline_mode = #tpu.pipeline_mode<synchronous>, transform_indices = @transform_1, window_bounds = array<i64: 32, 4>}, {pipeline_mode = #tpu.pipeline_mode<synchronous>, transform_indices = @transform_2, window_bounds = array<i64: 32, 1>}, {pipeline_mode = #tpu.pipeline_mode<synchronous>, transform_indices = @transform_3, window_bounds = array<i64: 4, 32>}, {pipeline_mode = #tpu.pipeline_mode<synchronous>, transform_indices = @transform_4, window_bounds = array<i64: 4, 1>}, {transform_indices = @transform_5, window_bounds = array<i64: 1, 4, 256>}]} {
    %c0 = arith.constant 0 : index
    %c0_0 = arith.constant 0 : index
    %c0_1 = arith.constant 0 : index
    %0 = vector.load %arg2[%c0, %c0_0, %c0_1] : memref<1x4x256xf32, #tpu.memory_space<vmem>>, vector<1x4x256xf32>
    %1 = vector.shape_cast %0 : vector<1x4x256xf32> to vector<4x256xf32>
    %c0_2 = arith.constant 0 : index
    %c0_3 = arith.constant 0 : index
    %2 = vector.load %arg3[%c0_2, %c0_3] : memref<32x4xf32, #tpu.memory_space<vmem>>, vector<32x4xf32>
    %c0_4 = arith.constant 0 : index
    %c0_5 = arith.constant 0 : index
    %3 = vector.load %arg4[%c0_4, %c0_5] : memref<32x1xf32, #tpu.memory_space<vmem>>, vector<32x1xf32>
    %c0_6 = arith.constant 0 : index
    %c0_7 = arith.constant 0 : index
    %4 = vector.load %arg5[%c0_6, %c0_7] : memref<4x32xf32, #tpu.memory_space<vmem>>, vector<4x32xf32>
    %cst = arith.constant dense<0.000000e+00> : vector<32x256xf32>
    %5 = tpu.matmul %2, %1, %cst {dimension_numbers = #tpu.dot_dimension_numbers<[1], [0], [0], [1], [0, 0, 1, 1], [], []>} : vector<32x4xf32>, vector<4x256xf32>, vector<32x256xf32> -> vector<32x256xf32>
    %6 = vector.broadcast %3 : vector<32x1xf32> to vector<32x256xf32>
    %7 = arith.addf %5, %6 : vector<32x256xf32>
    %cst_8 = arith.constant 5.000000e-01 : f32
    %8 = vector.broadcast %cst_8 : f32 to vector<32x256xf32>
    %9 = arith.mulf %8, %7 : vector<32x256xf32>
    %cst_9 = arith.constant 0.707106769 : f32
    %10 = vector.broadcast %cst_9 : f32 to vector<32x256xf32>
    %11 = arith.mulf %7, %10 : vector<32x256xf32>
    %12 = math.erf %11 : vector<32x256xf32>
    %cst_10 = arith.constant 1.000000e+00 : f32
    %13 = vector.broadcast %cst_10 : f32 to vector<32x256xf32>
    %14 = arith.addf %13, %12 : vector<32x256xf32>
    %15 = arith.mulf %9, %14 : vector<32x256xf32>
    %cst_11 = arith.constant dense<0.000000e+00> : vector<4x256xf32>
    %16 = tpu.matmul %4, %15, %cst_11 {dimension_numbers = #tpu.dot_dimension_numbers<[1], [0], [0], [1], [0, 0, 1, 1], [], []>} : vector<4x32xf32>, vector<32x256xf32>, vector<4x256xf32> -> vector<4x256xf32>
    %c0_12 = arith.constant 0 : index
    %c0_13 = arith.constant 0 : index
    %17 = vector.load %arg6[%c0_12, %c0_13] : memref<4x1xf32, #tpu.memory_space<vmem>>, vector<4x1xf32>
    %18 = vector.broadcast %17 : vector<4x1xf32> to vector<4x256xf32>
    %19 = arith.addf %16, %18 : vector<4x256xf32>
    %c0_14 = arith.constant 0 : index
    %c0_15 = arith.constant 0 : index
    %c0_16 = arith.constant 0 : index
    %20 = vector.load %arg7[%c0_14, %c0_15, %c0_16] : memref<1x4x256xf32, #tpu.memory_space<vmem>>, vector<1x4x256xf32>
    %21 = vector.shape_cast %20 : vector<1x4x256xf32> to vector<4x256xf32>
    %22 = vector.shape_cast %19 : vector<4x256xf32> to vector<1x4x256xf32>
    tpu.vector_store %arg7[%c0_14, %c0_15, %c0_16], %22 {strides = array<i32>} : memref<1x4x256xf32, #tpu.memory_space<vmem>>, vector<1x4x256xf32>,
    return
  }
  func.func @transform_0(%arg0: i32, %arg1: i32) -> (i32, i32, i32) {
    %c0_i32 = arith.constant 0 : i32
    %c0_i32_0 = arith.constant 0 : i32
    return %arg0, %c0_i32, %arg1 : i32, i32, i32
  }
  func.func @transform_1(%arg0: i32, %arg1: i32) -> (i32, i32) {
    %c0_i32 = arith.constant 0 : i32
    %c0_i32_0 = arith.constant 0 : i32
    %c0_i32_1 = arith.constant 0 : i32
    return %c0_i32, %c0_i32_0 : i32, i32
  }
  func.func @transform_2(%arg0: i32, %arg1: i32) -> (i32, i32) {
    %c0_i32 = arith.constant 0 : i32
    %c0_i32_0 = arith.constant 0 : i32
    %c0_i32_1 = arith.constant 0 : i32
    return %c0_i32, %c0_i32_0 : i32, i32
  }
  func.func @transform_3(%arg0: i32, %arg1: i32) -> (i32, i32) {
    %c0_i32 = arith.constant 0 : i32
    %c0_i32_0 = arith.constant 0 : i32
    %c0_i32_1 = arith.constant 0 : i32
    return %c0_i32, %c0_i32_0 : i32, i32
  }
  func.func @transform_4(%arg0: i32, %arg1: i32) -> (i32, i32) {
    %c0_i32 = arith.constant 0 : i32
    %c0_i32_0 = arith.constant 0 : i32
    %c0_i32_1 = arith.constant 0 : i32
    return %c0_i32, %c0_i32_0 : i32, i32
  }
  func.func @transform_5(%arg0: i32, %arg1: i32) -> (i32, i32, i32) {
    %c0_i32 = arith.constant 0 : i32
    %c0_i32_0 = arith.constant 0 : i32
    return %arg0, %c0_i32, %arg1 : i32, i32, i32
  }
}

</mosaic_0001>

<llo_original>
// kernel: cmlp_forward.1
$region0: #{cmlp_forward.1}
  #allocation0 [shape = 'u32[]', space=smem, size = 0x4, offset = 0x4, fixed_abs, tag = 'smem constant byte address 0x4 - core index']
  #allocation1 [shape = 'u32[72,128]{1,0:T(1,128)}', space=vmem, size = 0x9000, scoped, tag = 'internal scratch']
  %s0 = inlined_call_operand.vmem [shape: f32[2,4,256], index: 0, kind: input, shape index: {}]
  %s1 = inlined_call_operand.vmem [shape: f32[32,4], index: 1, kind: input, shape index: {}]
  %s2 = inlined_call_operand.vmem [shape: f32[32,1], index: 2, kind: input, shape index: {}]
  %s3 = inlined_call_operand.vmem [shape: f32[4,32], index: 3, kind: input, shape index: {}]
  %s4 = inlined_call_operand.vmem [shape: f32[4,1], index: 4, kind: input, shape index: {}]
  %s5 = inlined_call_operand.vmem [shape: f32[2,4,256], index: 5, kind: output, shape index: {}]
  %s6 = sld [smem:[#allocation0]]
  $region53: #{cmlp_forward.1} parent=0
    _
  %s8 = ssub.s32 1, %s6
  %s9 = scalar_select 0, %s8, %s6
  loop: start=0, step=1, limit=4
  $region2: #{cmlp_forward.1} parent=0 // loop_pre_header
    _
  $region3: #{cmlp_forward.1} parent=0 // loop_header
    %s11 = sphi 0, %s15
    %p12 = scmp.ge.s32.totalorder %s11, 4
    %s18 = sphi 0, %s30
    %s19 = sphi 0, %s26
    %s20 = sphi 0, %s18
    %s21 = sphi 0, %s19
    %s22 = sphi 0, %s20
    %s23 = sphi 0, %s21
    %s35 = sphi 0, %s37
    %s38 = sphi 0, %s35
    %s39 = sphi 0, %s38
    %s55 = sphi 0, %s39
    %s59 = sphi 0, %s59
    %s61 = sphi 0, %s59
    %s62 = sphi 0, %s61
    %s76 = sphi 0, %s62
    %s80 = sphi 0, %s80
    %s82 = sphi 0, %s80
    %s83 = sphi 0, %s82
    %s97 = sphi 0, %s83
    %s101 = sphi 0, %s101
    %s103 = sphi 0, %s101
    %s104 = sphi 0, %s103
    %s118 = sphi 0, %s104
    %s122 = sphi 0, %s122
    %s124 = sphi 0, %s122
    %s125 = sphi 0, %s124
    %s139 = sphi 0, %s125
    %s147 = sphi 0, %s149
    %s150 = sphi 0, %s147
    %s151 = sphi 0, %s150
    %s167 = sphi 0, %s151
  $region4: #{cmlp_forward.1} parent=0 // loop_header_branch
    %14 = sbr.rel (%p12) target = $region8
  $region5: #{cmlp_forward.1} parent=0 // loop_body
    %s16 = ssub.s32 %s11, 1
    %s17 = ssub.s32 %s11, 2
    %s24 = sadd.s32 1, %s19
    %p25 = scmp.ge.s32.totalorder %s24, 1
    %s26 = scalar_select %p25, 0, %s24
    %s27 = sadd.s32 1, %s18
    %s28 = scalar_select %p25, %s27, %s18
    %p29 = scmp.ge.s32.totalorder %s28, 2
    %s30 = scalar_select %p29, 0, %s28
    %s31 = ssub.s32 %s18, %s30
    %s32 = ssub.s32 %s19, %s26
    %s33 = sor.u32 %s31, %s32
    %p34 = scmp.eq.s32.totalorder %s33, 0
    %s36 = sadd.s32 %s35, 1
    %s37 = scalar_select %p34, %s35, %s36
    %p40 = pneg %p34
    %p41 = scmp.eq.s32.totalorder %s11, 1
    %p42 = por %p40, %p41
    %p43 = scmp.ne.s32.totalorder %s35, %s38
    %p44 = scmp.eq.s32.totalorder %s11, 0
    %p45 = por %p43, %p44
    %p46 = scmp.ne.s32.totalorder %s35, %s38
    %p47 = scmp.eq.s32.totalorder %s16, 1
    %p48 = por %p46, %p47
    %p49 = scmp.ne.s32.totalorder %s38, %s39
    %p50 = scmp.eq.s32.totalorder %s16, 0
    %p51 = por %p49, %p50
    %p52 = scmp.ne.s32.totalorder %s38, %s39
    %p53 = scmp.eq.s32.totalorder %s17, 1
    %p54 = por %p52, %p53
    %p56 = scmp.ne.s32.totalorder %s39, %s55
    %p57 = scmp.eq.s32.totalorder %s17, 0
    %p58 = por %p56, %p57
    %s60 = sadd.s32 %s59, 1
    %p63 = scmp.eq.s32.totalorder %s11, 1
    %p64 = scmp.ne.s32.totalorder %s59, %s61
    %p65 = scmp.eq.s32.totalorder %s11, 0
    %p66 = por %p64, %p65
    %p67 = scmp.ne.s32.totalorder %s59, %s61
    %p68 = scmp.eq.s32.totalorder %s16, 1
    %p69 = por %p67, %p68
    %p70 = scmp.ne.s32.totalorder %s61, %s62
    %p71 = scmp.eq.s32.totalorder %s16, 0
    %p72 = por %p70, %p71
    %p73 = scmp.ne.s32.totalorder %s61, %s62
    %p74 = scmp.eq.s32.totalorder %s17, 1
    %p75 = por %p73, %p74
    %p77 = scmp.ne.s32.totalorder %s62, %s76
    %p78 = scmp.eq.s32.totalorder %s17, 0
    %p79 = por %p77, %p78
    %s81 = sadd.s32 %s80, 1
    %p84 = scmp.eq.s32.totalorder %s11, 1
    %p85 = scmp.ne.s32.totalorder %s80, %s82
    %p86 = scmp.eq.s32.totalorder %s11, 0
    %p87 = por %p85, %p86
    %p88 = scmp.ne.s32.totalorder %s80, %s82
    %p89 = scmp.eq.s32.totalorder %s16, 1
    %p90 = por %p88, %p89
    %p91 = scmp.ne.s32.totalorder %s82, %s83
    %p92 = scmp.eq.s32.totalorder %s16, 0
    %p93 = por %p91, %p92
    %p94 = scmp.ne.s32.totalorder %s82, %s83
    %p95 = scmp.eq.s32.totalorder %s17, 1
    %p96 = por %p94, %p95
    %p98 = scmp.ne.s32.totalorder %s83, %s97
    %p99 = scmp.eq.s32.totalorder %s17, 0
    %p100 = por %p98, %p99
    %s102 = sadd.s32 %s101, 1
    %p105 = scmp.eq.s32.totalorder %s11, 1
    %p106 = scmp.ne.s32.totalorder %s101, %s103
    %p107 = scmp.eq.s32.totalorder %s11, 0
    %p108 = por %p106, %p107
    %p109 = scmp.ne.s32.totalorder %s101, %s103
    %p110 = scmp.eq.s32.totalorder %s16, 1
    %p111 = por %p109, %p110
    %p112 = scmp.ne.s32.totalorder %s103, %s104
    %p113 = scmp.eq.s32.totalorder %s16, 0
    %p114 = por %p112, %p113
    %p115 = scmp.ne.s32.totalorder %s103, %s104
    %p116 = scmp.eq.s32.totalorder %s17, 1
    %p117 = por %p115, %p116
    %p119 = scmp.ne.s32.totalorder %s104, %s118
    %p120 = scmp.eq.s32.totalorder %s17, 0
    %p121 = por %p119, %p120
    %s123 = sadd.s32 %s122, 1
    %p126 = scmp.eq.s32.totalorder %s11, 1
    %p127 = scmp.ne.s32.totalorder %s122, %s124
    %p128 = scmp.eq.s32.totalorder %s11, 0
    %p129 = por %p127, %p128
    %p130 = scmp.ne.s32.totalorder %s122, %s124
    %p131 = scmp.eq.s32.totalorder %s16, 1
    %p132 = por %p130, %p131
    %p133 = scmp.ne.s32.totalorder %s124, %s125
    %p134 = scmp.eq.s32.totalorder %s16, 0
    %p135 = por %p133, %p134
    %p136 = scmp.ne.s32.totalorder %s124, %s125
    %p137 = scmp.eq.s32.totalorder %s17, 1
    %p138 = por %p136, %p137
    %p140 = scmp.ne.s32.totalorder %s125, %s139
    %p141 = scmp.eq.s32.totalorder %s17, 0
    %p142 = por %p140, %p141
    %s143 = ssub.s32 %s18, %s30
    %s144 = ssub.s32 %s19, %s26
    %s145 = sor.u32 %s143, %s144
    %p146 = scmp.eq.s32.totalorder %s145, 0
    %s148 = sadd.s32 %s147, 1
    %s149 = scalar_select %p146, %s147, %s148
    %p152 = pneg %p146
    %p153 = scmp.eq.s32.totalorder %s11, 1
    %p154 = por %p152, %p153
    %p155 = scmp.ne.s32.totalorder %s147, %s150
    %p156 = scmp.eq.s32.totalorder %s11, 0
    %p157 = por %p155, %p156
    %p158 = scmp.ne.s32.totalorder %s147, %s150
    %p159 = scmp.eq.s32.totalorder %s16, 1
    %p160 = por %p158, %p159
    %p161 = scmp.ne.s32.totalorder %s150, %s151
    %p162 = scmp.eq.s32.totalorder %s16, 0
    %p163 = por %p161, %p162
    %p164 = scmp.ne.s32.totalorder %s150, %s151
    %p165 = scmp.eq.s32.totalorder %s17, 1
    %p166 = por %p164, %p165
    %p168 = scmp.ne.s32.totalorder %s151, %s167
    %p169 = scmp.eq.s32.totalorder %s17, 0
    %p170 = por %p168, %p169
    %p171 = scmp.le.s32.totalorder 1, %s11
    %p172 = scmp.lt.s32.totalorder %s11, 3
    %p173 = pnand %p171, %p172
    %p174 = pneg %p173
    // Predicated region
    $region9: #{cmlp_forward.1} parent=5 // pred_check
      _
    $region10: #{cmlp_forward.1} parent=5 // pred_check_branch
      %176 = sbr.rel (%p173) target = $region12
    $region11: #{cmlp_forward.1} parent=5 // pred_region
      %s177 = ssub.s32 %s11, 1
      // Predicated region
      $region13: #{cmlp_forward.1} parent=11 // pred_check
        %p178 = pneg %p72
      $region14: #{cmlp_forward.1} parent=11 // pred_check_branch
        %180 = sbr.rel (%p178) target = $region16
      $region15: #{cmlp_forward.1} parent=11 // pred_region
        _
      $region16: #{cmlp_forward.1} parent=11 // pred_fallthru
        _
      // Predicated region
      $region17: #{cmlp_forward.1} parent=11 // pred_check
        %p181 = pneg %p93
      $region18: #{cmlp_forward.1} parent=11 // pred_check_branch
        %183 = sbr.rel (%p181) target = $region20
      $region19: #{cmlp_forward.1} parent=11 // pred_region
        _
      $region20: #{cmlp_forward.1} parent=11 // pred_fallthru
        _
      // Predicated region
      $region21: #{cmlp_forward.1} parent=11 // pred_check
        %p184 = pneg %p114
      $region22: #{cmlp_forward.1} parent=11 // pred_check_branch
        %186 = sbr.rel (%p184) target = $region24
      $region23: #{cmlp_forward.1} parent=11 // pred_region
        _
      $region24: #{cmlp_forward.1} parent=11 // pred_fallthru
        _
      // Predicated region
      $region25: #{cmlp_forward.1} parent=11 // pred_check
        %p187 = pneg %p135
      $region26: #{cmlp_forward.1} parent=11 // pred_check_branch
        %189 = sbr.rel (%p187) target = $region28
      $region27: #{cmlp_forward.1} parent=11 // pred_region
        _
      $region28: #{cmlp_forward.1} parent=11 // pred_fallthru
        _
    $region12: #{cmlp_forward.1} parent=5 // pred_fallthru
      _
    %p190 = scmp.lt.s32.totalorder %s11, 2
    // Predicated region
    $region29: #{cmlp_forward.1} parent=5 // pred_check
      %p191 = pneg %p190
    $region30: #{cmlp_forward.1} parent=5 // pred_check_branch
      %193 = sbr.rel (%p191) target = $region32
    $region31: #{cmlp_forward.1} parent=5 // pred_region
      // Predicated region
      $region33: #{cmlp_forward.1} parent=31 // pred_check
        %p194 = pneg %p45
      $region34: #{cmlp_forward.1} parent=31 // pred_check_branch
        %196 = sbr.rel (%p194) target = $region36
      $region35: #{cmlp_forward.1} parent=31 // pred_region
        %s197 = smul.u32 2, %s19
        %p198 = scmp.lt.s32.totalorder %s18, 1
        %s199 = scalar_select %p198, %s18, 1
        %p200 = scmp.lt.s32.totalorder %s197, 1
        %s201 = scalar_select %p200, %s197, 1
        %s202 = smul.addr %s199, 2
        %s203 = sadd.s32 %s201, %s202
        %s204 = smul.addr %s203, 4
        %s205 = scalar_lea.vmem %s0, %s204
        %s206 = smul.u32 2, %s19
      $region36: #{cmlp_forward.1} parent=31 // pred_fallthru
        _
    $region32: #{cmlp_forward.1} parent=5 // pred_fallthru
      _
    %p207 = scmp.le.s32.totalorder 1, %s11
    %p208 = scmp.lt.s32.totalorder %s11, 3
    %p209 = pnand %p207, %p208
    %p210 = pneg %p209
    // Predicated region
    $region37: #{cmlp_forward.1} parent=5 // pred_check
      _
    $region38: #{cmlp_forward.1} parent=5 // pred_check_branch
      %212 = sbr.rel (%p209) target = $region40
    $region39: #{cmlp_forward.1} parent=5 // pred_region
      %s213 = ssub.s32 %s11, 1
      %s214 = smul.u32 2, %s21
      %p215 = scmp.lt.s32.totalorder %s20, 1
      %s216 = scalar_select %p215, %s20, 1
      %p217 = scmp.lt.s32.totalorder %s214, 1
      %s218 = scalar_select %p217, %s214, 1
      %s219 = smul.addr %s216, 2
      %s220 = sadd.s32 %s218, %s219
      %s221 = smul.addr %s220, 4
      %s222 = scalar_lea.vmem %s0, %s221
      %p223 = pneg %p51
      %p224 = pneg %p48
      %p225 = pneg %p72
      %p226 = pneg %p69
      %p227 = pneg %p93
      %p228 = pneg %p90
      %p229 = pneg %p114
      %p230 = pneg %p111
      %p231 = pneg %p135
      %p232 = pneg %p132
      %p233 = pneg %p163
      %p234 = pneg %p160
      %s235 = smul.u32 2, %s21
      %p236 = scmp.lt.s32.totalorder %s20, 1
      %s237 = scalar_select %p236, %s20, 1
      %p238 = scmp.lt.s32.totalorder %s235, 1
      %s239 = scalar_select %p238, %s235, 1
      %s240 = smul.addr %s237, 2
      %s241 = sadd.s32 %s239, %s240
      %s242 = smul.addr %s241, 4
      %s243 = scalar_lea.vmem %s5, %s242
      %s244 = smul.u32 2, %s21
      %p245 = scmp.lt.s32.totalorder %s20, 1
      %s246 = scalar_select %p245, %s20, 1
      %p247 = scmp.lt.s32.totalorder %s244, 1
      %s248 = scalar_select %p247, %s244, 1
      %s249 = smul.addr %s246, 2
      %s250 = sadd.s32 %s248, %s249
      %s251 = smul.addr %s250, 4
      %s252 = scalar_lea.vmem %s0, %s251
      %s253 = smul.u32 2, %s21
      %s254 = smul.u32 2, %s21
      %p255 = scmp.lt.s32.totalorder %s20, 1
      %s256 = scalar_select %p255, %s20, 1
      %p257 = scmp.lt.s32.totalorder %s254, 1
      %s258 = scalar_select %p257, %s254, 1
      %s259 = smul.addr %s256, 2
      %s260 = sadd.s32 %s258, %s259
      %s261 = smul.addr %s260, 4
      %s262 = scalar_lea.vmem %s5, %s261
      %s263 = smul.u32 2, %s21
      %v264 = vld [vmem:[%s252] sm:$0xff]
      %v265 = vld [vmem:[%s1] sm:$0xff]
      %v266 = vld [vmem:[%s1 + $0x8] sm:$0xff]
      %v267 = vld [vmem:[%s1 + $0x10] sm:$0xff]
      %v268 = vld [vmem:[%s1 + $0x18] sm:$0xff]
      %v269 = vld [vmem:[%s2] sm:$0xff]
      %v270 = vld [vmem:[%s2 + $0x8] sm:$0xff]
      %v271 = vld [vmem:[%s2 + $0x10] sm:$0xff]
      %v272 = vld [vmem:[%s2 + $0x18] sm:$0xff]
      %v273 = vld [vmem:[%s3] sm:$0xf]
      %275 = vset.pattern.permute.xlu0 0
      %276 = vperm.xlu0 %275, %v269
      %v277 = vpop.permute.xlu0 %276
      %280 = vset.pattern.permute.xlu0 0
      %281 = vperm.xlu0 %280, %v270
      %v282 = vpop.permute.xlu0 %281
      %285 = vset.pattern.permute.xlu0 0
      %286 = vperm.xlu0 %285, %v271
      %v287 = vpop.permute.xlu0 %286
      %290 = vset.pattern.permute.xlu0 0
      %291 = vperm.xlu0 %290, %v272
      %v292 = vpop.permute.xlu0 %291
      %295 = vst [vmem:[#allocation1] ss:$2 sm:$0xff] %v264
      %v296 = vld.sshfl [vmem:[#allocation1] sm:$0xff pattern:$0x75316420]
      %v297 = vld.sshfl [vmem:[#allocation1 + $0x8] sm:$0xff pattern:$0x75316420]
      %vm298 = vcmask 31744
      %v300 = vsel %vm298, %v265, 0
      %v303 = vsel %vm298, %v266, 0
      %v306 = vsel %vm298, %v267, 0
      %v309 = vsel %vm298, %v268, 0
      %vm311 = vcmask 1043456
      %v312 = vsel %vm311, %v296, 0
      %v314 = vsel %vm311, %v297, 0
      %316 = vmatpush.msra.mxu0 0.0
      %317 = vmatpush.msra.mxu0 0.0
      %318 = vmatpush.msra.mxu0 0.0
      %319 = vmatpush.msra.mxu0 0.0
      %320 = vmatpush.msra.mxu0 0.0
      %321 = vmatpush.msra.mxu0 0.0
      %322 = vmatpush.msra.mxu0 0.0
      %323 = vmatpush.msra.mxu0 0.0
      %324 = vmatpush.msra.mxu0 0.0
      %325 = vmatpush.msra.mxu0 0.0
      %326 = vmatpush.msra.mxu0 0.0
      %327 = vmatpush.msra.mxu0 0.0
      %328 = vmatpush.msra.mxu0 0.0
      %329 = vmatpush.msra.mxu0 0.0
      %330 = vmatpush.msra.mxu0 0.0
      %331 = vmatpush.msra.mxu0 %v312
      %332 = vmatmul.f32.gmra.mxu0 %v300
      %v333 = vpop.f32.mrf.mxu0
      %v334 = vadd.f32 %v277, %v333
      %335 = vmatmul.f32.gmra.mxu0 %v303
      %v336 = vpop.f32.mrf.mxu0
      %v337 = vadd.f32 %v282, %v336
      %338 = vmatmul.f32.gmra.mxu0 %v306
      %v339 = vpop.f32.mrf.mxu0
      %v340 = vadd.f32 %v287, %v339
      %341 = vmatmul.f32.gmra.mxu0 %v309
      %v342 = vpop.f32.mrf.mxu0
      %v343 = vadd.f32 %v292, %v342
      %344 = vdwg.mxu0
      %345 = vmatpush.msra.mxu0 0.0
      %346 = vmatpush.msra.mxu0 0.0
      %347 = vmatpush.msra.mxu0 0.0
      %348 = vmatpush.msra.mxu0 0.0
      %349 = vmatpush.msra.mxu0 0.0
      %350 = vmatpush.msra.mxu0 0.0
      %351 = vmatpush.msra.mxu0 0.0
      %352 = vmatpush.msra.mxu0 0.0
      %353 = vmatpush.msra.mxu0 0.0
      %354 = vmatpush.msra.mxu0 0.0
      %355 = vmatpush.msra.mxu0 0.0
      %356 = vmatpush.msra.mxu0 0.0
      %357 = vmatpush.msra.mxu0 0.0
      %358 = vmatpush.msra.mxu0 0.0
      %359 = vmatpush.msra.mxu0 0.0
      %360 = vmatpush.msra.mxu0 %v314
      %361 = vmatmul.f32.gmra.mxu0 %v300
      %v362 = vpop.f32.mrf.mxu0
      %v363 = vadd.f32 %v277, %v362
      %364 = vmatmul.f32.gmra.mxu0 %v303
      %v365 = vpop.f32.mrf.mxu0
      %v366 = vadd.f32 %v282, %v365
      %367 = vmatmul.f32.gmra.mxu0 %v306
      %v368 = vpop.f32.mrf.mxu0
      %v369 = vadd.f32 %v287, %v368
      %370 = vmatmul.f32.gmra.mxu0 %v309
      %v371 = vpop.f32.mrf.mxu0
      %v372 = vadd.f32 %v292, %v371
      %373 = vdwg.mxu0
      %v374 = vmul.f32 %v334, 0.5
      %v375 = vmul.f32 %v363, 0.5
      %v376 = vmul.f32 %v337, 0.5
      %v377 = vmul.f32 %v366, 0.5
      %v378 = vmul.f32 %v340, 0.5
      %v379 = vmul.f32 %v369, 0.5
      %v380 = vmul.f32 %v343, 0.5
      %v381 = vmul.f32 %v372, 0.5
      %v382 = vmul.f32 %v334, 0.70710677
      %v383 = vmul.f32 %v363, 0.70710677
      %v384 = vmul.f32 %v337, 0.70710677
      %v385 = vmul.f32 %v366, 0.70710677
      %v386 = vmul.f32 %v340, 0.70710677
      %v387 = vmul.f32 %v369, 0.70710677
      %v388 = vmul.f32 %v343, 0.70710677
      %v389 = vmul.f32 %v372, 0.70710677
      %v390 = vmul.f32 %v382, %v382
      %v391 = vmin.f32 16.0, %v390
      %v392 = vmul.f32 %v391, 2.1237322e-06
      %v393 = vadd.f32 %v392, 0.00028619796
      %v394 = vmul.f32 %v391, %v393
      %v395 = vadd.f32 %v394, 0.0036580483
      %v396 = vmul.f32 %v391, %v395
      %v397 = vadd.f32 %v396, 0.05243302
      %v398 = vmul.f32 %v391, %v397
      %v399 = vadd.f32 %v398, 0.18741608
      %v400 = vmul.f32 %v391, %v399
      %v401 = vadd.f32 %v400, 1.1283791
      %v402 = vmul.f32 %v382, %v401
      %v403 = vmul.f32 %v391, 3.8918573e-05
      %v404 = vadd.f32 %v403, 0.001143296
      %v405 = vmul.f32 %v391, %v404
      %v406 = vadd.f32 %v405, 0.014752088
      %v407 = vmul.f32 %v391, %v406
      %v408 = vadd.f32 %v407, 0.112945676
      %v409 = vmul.f32 %v391, %v408
      %v410 = vadd.f32 %v409, 0.4994258
      %v411 = vmul.f32 %v391, %v410
      %v412 = vadd.f32 %v411, 1.0
      %v413 = vrcp.pop %v412
      %v414 = vmul.f32 %v412, %v413
      %v415 = vsub.f32 1.0, %v414
      %v416 = vmul.f32 %v413, %v415
      %v417 = vadd.f32 %v413, %v416
      %vm418 = vweird.f32 %v412
      %vm419 = vweird.f32 %v413
      %vm420 = vmor %vm418, %vm419
      %v421 = vsel %vm420, %v413, %v417
      %v422 = vand.u32 2147483647, %v412
      %vm423 = vcmp.eq.f32.partialorder %v422, 8.507059e+37
      %v424 = vand.u32 %v412, 2147483648
      %v425 = vor.u32 1.1754944e-38, %v424
      %v426 = vsel %vm423, %v425, %v421
      %v427 = vmul.f32 %v402, %v426
      %v428 = vmin.f32 %v427, 1.0
      %v429 = vmax.f32 %v428, -1.0
      %v430 = vmul.f32 %v383, %v383
      %v431 = vmin.f32 16.0, %v430
      %v432 = vmul.f32 %v431, 2.1237322e-06
      %v433 = vadd.f32 %v432, 0.00028619796
      %v434 = vmul.f32 %v431, %v433
      %v435 = vadd.f32 %v434, 0.0036580483
      %v436 = vmul.f32 %v431, %v435
      %v437 = vadd.f32 %v436, 0.05243302
      %v438 = vmul.f32 %v431, %v437
      %v439 = vadd.f32 %v438, 0.18741608
      %v440 = vmul.f32 %v431, %v439
      %v441 = vadd.f32 %v440, 1.1283791
      %v442 = vmul.f32 %v383, %v441
      %v443 = vmul.f32 %v431, 3.8918573e-05
      %v444 = vadd.f32 %v443, 0.001143296
      %v445 = vmul.f32 %v431, %v444
      %v446 = vadd.f32 %v445, 0.014752088
      %v447 = vmul.f32 %v431, %v446
      %v448 = vadd.f32 %v447, 0.112945676
      %v449 = vmul.f32 %v431, %v448
      %v450 = vadd.f32 %v449, 0.4994258
      %v451 = vmul.f32 %v431, %v450
      %v452 = vadd.f32 %v451, 1.0
      %v453 = vrcp.pop %v452
      %v454 = vmul.f32 %v452, %v453
      %v455 = vsub.f32 1.0, %v454
      %v456 = vmul.f32 %v453, %v455
      %v457 = vadd.f32 %v453, %v456
      %vm458 = vweird.f32 %v452
      %vm459 = vweird.f32 %v453
      %vm460 = vmor %vm458, %vm459
      %v461 = vsel %vm460, %v453, %v457
      %v462 = vand.u32 2147483647, %v452
      %vm463 = vcmp.eq.f32.partialorder %v462, 8.507059e+37
      %v464 = vand.u32 %v452, 2147483648
      %v465 = vor.u32 1.1754944e-38, %v464
      %v466 = vsel %vm463, %v465, %v461
      %v467 = vmul.f32 %v442, %v466
      %v468 = vmin.f32 %v467, 1.0
      %v469 = vmax.f32 %v468, -1.0
      %v470 = vmul.f32 %v384, %v384
      %v471 = vmin.f32 16.0, %v470
      %v472 = vmul.f32 %v471, 2.1237322e-06
      %v473 = vadd.f32 %v472, 0.00028619796
      %v474 = vmul.f32 %v471, %v473
      %v475 = vadd.f32 %v474, 0.0036580483
      %v476 = vmul.f32 %v471, %v475
      %v477 = vadd.f32 %v476, 0.05243302
      %v478 = vmul.f32 %v471, %v477
      %v479 = vadd.f32 %v478, 0.18741608
      %v480 = vmul.f32 %v471, %v479
      %v481 = vadd.f32 %v480, 1.1283791
      %v482 = vmul.f32 %v384, %v481
      %v483 = vmul.f32 %v471, 3.8918573e-05
      %v484 = vadd.f32 %v483, 0.001143296
      %v485 = vmul.f32 %v471, %v484
      %v486 = vadd.f32 %v485, 0.014752088
      %v487 = vmul.f32 %v471, %v486
      %v488 = vadd.f32 %v487, 0.112945676
      %v489 = vmul.f32 %v471, %v488
      %v490 = vadd.f32 %v489, 0.4994258
      %v491 = vmul.f32 %v471, %v490
      %v492 = vadd.f32 %v491, 1.0
      %v493 = vrcp.pop %v492
      %v494 = vmul.f32 %v492, %v493
      %v495 = vsub.f32 1.0, %v494
      %v496 = vmul.f32 %v493, %v495
      %v497 = vadd.f32 %v493, %v496
      %vm498 = vweird.f32 %v492
      %vm499 = vweird.f32 %v493
      %vm500 = vmor %vm498, %vm499
      %v501 = vsel %vm500, %v493, %v497
      %v502 = vand.u32 2147483647, %v492
      %vm503 = vcmp.eq.f32.partialorder %v502, 8.507059e+37
      %v504 = vand.u32 %v492, 2147483648
      %v505 = vor.u32 1.1754944e-38, %v504
      %v506 = vsel %vm503, %v505, %v501
      %v507 = vmul.f32 %v482, %v506
      %v508 = vmin.f32 %v507, 1.0
      %v509 = vmax.f32 %v508, -1.0
      %v510 = vmul.f32 %v385, %v385
      %v511 = vmin.f32 16.0, %v510
      %v512 = vmul.f32 %v511, 2.1237322e-06
      %v513 = vadd.f32 %v512, 0.00028619796
      %v514 = vmul.f32 %v511, %v513
      %v515 = vadd.f32 %v514, 0.0036580483
      %v516 = vmul.f32 %v511, %v515
      %v517 = vadd.f32 %v516, 0.05243302
      %v518 = vmul.f32 %v511, %v517
      %v519 = vadd.f32 %v518, 0.18741608
      %v520 = vmul.f32 %v511, %v519
      %v521 = vadd.f32 %v520, 1.1283791
      %v522 = vmul.f32 %v385, %v521
      %v523 = vmul.f32 %v511, 3.8918573e-05
      %v524 = vadd.f32 %v523, 0.001143296
      %v525 = vmul.f32 %v511, %v524
      %v526 = vadd.f32 %v525, 0.014752088
      %v527 = vmul.f32 %v511, %v526
      %v528 = vadd.f32 %v527, 0.112945676
      %v529 = vmul.f32 %v511, %v528
      %v530 = vadd.f32 %v529, 0.4994258
      %v531 = vmul.f32 %v511, %v530
      %v532 = vadd.f32 %v531, 1.0
      %v533 = vrcp.pop %v532
      %v534 = vmul.f32 %v532, %v533
      %v535 = vsub.f32 1.0, %v534
      %v536 = vmul.f32 %v533, %v535
      %v537 = vadd.f32 %v533, %v536
      %vm538 = vweird.f32 %v532
      %vm539 = vweird.f32 %v533
      %vm540 = vmor %vm538, %vm539
      %v541 = vsel %vm540, %v533, %v537
      %v542 = vand.u32 2147483647, %v532
      %vm543 = vcmp.eq.f32.partialorder %v542, 8.507059e+37
      %v544 = vand.u32 %v532, 2147483648
      %v545 = vor.u32 1.1754944e-38, %v544
      %v546 = vsel %vm543, %v545, %v541
      %v547 = vmul.f32 %v522, %v546
      %v548 = vmin.f32 %v547, 1.0
      %v549 = vmax.f32 %v548, -1.0
      %v550 = vmul.f32 %v386, %v386
      %v551 = vmin.f32 16.0, %v550
      %v552 = vmul.f32 %v551, 2.1237322e-06
      %v553 = vadd.f32 %v552, 0.00028619796
      %v554 = vmul.f32 %v551, %v553
      %v555 = vadd.f32 %v554, 0.0036580483
      %v556 = vmul.f32 %v551, %v555
      %v557 = vadd.f32 %v556, 0.05243302
      %v558 = vmul.f32 %v551, %v557
      %v559 = vadd.f32 %v558, 0.18741608
      %v560 = vmul.f32 %v551, %v559
      %v561 = vadd.f32 %v560, 1.1283791
      %v562 = vmul.f32 %v386, %v561
      %v563 = vmul.f32 %v551, 3.8918573e-05
      %v564 = vadd.f32 %v563, 0.001143296
      %v565 = vmul.f32 %v551, %v564
      %v566 = vadd.f32 %v565, 0.014752088
      %v567 = vmul.f32 %v551, %v566
      %v568 = vadd.f32 %v567, 0.112945676
      %v569 = vmul.f32 %v551, %v568
      %v570 = vadd.f32 %v569, 0.4994258
      %v571 = vmul.f32 %v551, %v570
      %v572 = vadd.f32 %v571, 1.0
      %v573 = vrcp.pop %v572
      %v574 = vmul.f32 %v572, %v573
      %v575 = vsub.f32 1.0, %v574
      %v576 = vmul.f32 %v573, %v575
      %v577 = vadd.f32 %v573, %v576
      %vm578 = vweird.f32 %v572
      %vm579 = vweird.f32 %v573
      %vm580 = vmor %vm578, %vm579
      %v581 = vsel %vm580, %v573, %v577
      %v582 = vand.u32 2147483647, %v572
      %vm583 = vcmp.eq.f32.partialorder %v582, 8.507059e+37
      %v584 = vand.u32 %v572, 2147483648
      %v585 = vor.u32 1.1754944e-38, %v584
      %v586 = vsel %vm583, %v585, %v581
      %v587 = vmul.f32 %v562, %v586
      %v588 = vmin.f32 %v587, 1.0
      %v589 = vmax.f32 %v588, -1.0
      %v590 = vmul.f32 %v387, %v387
      %v591 = vmin.f32 16.0, %v590
      %v592 = vmul.f32 %v591, 2.1237322e-06
      %v593 = vadd.f32 %v592, 0.00028619796
      %v594 = vmul.f32 %v591, %v593
      %v595 = vadd.f32 %v594, 0.0036580483
      %v596 = vmul.f32 %v591, %v595
      %v597 = vadd.f32 %v596, 0.05243302
      %v598 = vmul.f32 %v591, %v597
      %v599 = vadd.f32 %v598, 0.18741608
      %v600 = vmul.f32 %v591, %v599
      %v601 = vadd.f32 %v600, 1.1283791
      %v602 = vmul.f32 %v387, %v601
      %v603 = vmul.f32 %v591, 3.8918573e-05
      %v604 = vadd.f32 %v603, 0.001143296
      %v605 = vmul.f32 %v591, %v604
      %v606 = vadd.f32 %v605, 0.014752088
      %v607 = vmul.f32 %v591, %v606
      %v608 = vadd.f32 %v607, 0.112945676
      %v609 = vmul.f32 %v591, %v608
      %v610 = vadd.f32 %v609, 0.4994258
      %v611 = vmul.f32 %v591, %v610
      %v612 = vadd.f32 %v611, 1.0
      %v613 = vrcp.pop %v612
      %v614 = vmul.f32 %v612, %v613
      %v615 = vsub.f32 1.0, %v614
      %v616 = vmul.f32 %v613, %v615
      %v617 = vadd.f32 %v613, %v616
      %vm618 = vweird.f32 %v612
      %vm619 = vweird.f32 %v613
      %vm620 = vmor %vm618, %vm619
      %v621 = vsel %vm620, %v613, %v617
      %v622 = vand.u32 2147483647, %v612
      %vm623 = vcmp.eq.f32.partialorder %v622, 8.507059e+37
      %v624 = vand.u32 %v612, 2147483648
      %v625 = vor.u32 1.1754944e-38, %v624
      %v626 = vsel %vm623, %v625, %v621
      %v627 = vmul.f32 %v602, %v626
      %v628 = vmin.f32 %v627, 1.0
      %v629 = vmax.f32 %v628, -1.0
      %v630 = vmul.f32 %v388, %v388
      %v631 = vmin.f32 16.0, %v630
      %v632 = vmul.f32 %v631, 2.1237322e-06
      %v633 = vadd.f32 %v632, 0.00028619796
      %v634 = vmul.f32 %v631, %v633
      %v635 = vadd.f32 %v634, 0.0036580483
      %v636 = vmul.f32 %v631, %v635
      %v637 = vadd.f32 %v636, 0.05243302
      %v638 = vmul.f32 %v631, %v637
      %v639 = vadd.f32 %v638, 0.18741608
      %v640 = vmul.f32 %v631, %v639
      %v641 = vadd.f32 %v640, 1.1283791
      %v642 = vmul.f32 %v388, %v641
      %v643 = vmul.f32 %v631, 3.8918573e-05
      %v644 = vadd.f32 %v643, 0.001143296
      %v645 = vmul.f32 %v631, %v644
      %v646 = vadd.f32 %v645, 0.014752088
      %v647 = vmul.f32 %v631, %v646
      %v648 = vadd.f32 %v647, 0.112945676
      %v649 = vmul.f32 %v631, %v648
      %v650 = vadd.f32 %v649, 0.4994258
      %v651 = vmul.f32 %v631, %v650
      %v652 = vadd.f32 %v651, 1.0
      %v653 = vrcp.pop %v652
      %v654 = vmul.f32 %v652, %v653
      %v655 = vsub.f32 1.0, %v654
      %v656 = vmul.f32 %v653, %v655
      %v657 = vadd.f32 %v653, %v656
      %vm658 = vweird.f32 %v652
      %vm659 = vweird.f32 %v653
      %vm660 = vmor %vm658, %vm659
      %v661 = vsel %vm660, %v653, %v657
      %v662 = vand.u32 2147483647, %v652
      %vm663 = vcmp.eq.f32.partialorder %v662, 8.507059e+37
      %v664 = vand.u32 %v652, 2147483648
      %v665 = vor.u32 1.1754944e-38, %v664
      %v666 = vsel %vm663, %v665, %v661
      %v667 = vmul.f32 %v642, %v666
      %v668 = vmin.f32 %v667, 1.0
      %v669 = vmax.f32 %v668, -1.0
      %v670 = vmul.f32 %v389, %v389
      %v671 = vmin.f32 16.0, %v670
      %v672 = vmul.f32 %v671, 2.1237322e-06
      %v673 = vadd.f32 %v672, 0.00028619796
      %v674 = vmul.f32 %v671, %v673
      %v675 = vadd.f32 %v674, 0.0036580483
      %v676 = vmul.f32 %v671, %v675
      %v677 = vadd.f32 %v676, 0.05243302
      %v678 = vmul.f32 %v671, %v677
      %v679 = vadd.f32 %v678, 0.18741608
      %v680 = vmul.f32 %v671, %v679
      %v681 = vadd.f32 %v680, 1.1283791
      %v682 = vmul.f32 %v389, %v681
      %v683 = vmul.f32 %v671, 3.8918573e-05
      %v684 = vadd.f32 %v683, 0.001143296
      %v685 = vmul.f32 %v671, %v684
      %v686 = vadd.f32 %v685, 0.014752088
      %v687 = vmul.f32 %v671, %v686
      %v688 = vadd.f32 %v687, 0.112945676
      %v689 = vmul.f32 %v671, %v688
      %v690 = vadd.f32 %v689, 0.4994258
      %v691 = vmul.f32 %v671, %v690
      %v692 = vadd.f32 %v691, 1.0
      %v693 = vrcp.pop %v692
      %v694 = vmul.f32 %v692, %v693
      %v695 = vsub.f32 1.0, %v694
      %v696 = vmul.f32 %v693, %v695
      %v697 = vadd.f32 %v693, %v696
      %vm698 = vweird.f32 %v692
      %vm699 = vweird.f32 %v693
      %vm700 = vmor %vm698, %vm699
      %v701 = vsel %vm700, %v693, %v697
      %v702 = vand.u32 2147483647, %v692
      %vm703 = vcmp.eq.f32.partialorder %v702, 8.507059e+37
      %v704 = vand.u32 %v692, 2147483648
      %v705 = vor.u32 1.1754944e-38, %v704
      %v706 = vsel %vm703, %v705, %v701
      %v707 = vmul.f32 %v682, %v706
      %v708 = vmin.f32 %v707, 1.0
      %v709 = vmax.f32 %v708, -1.0
      %v710 = vadd.f32 %v429, 1.0
      %v711 = vadd.f32 %v469, 1.0
      %v712 = vadd.f32 %v509, 1.0
      %v713 = vadd.f32 %v549, 1.0
      %v714 = vadd.f32 %v589, 1.0
      %v715 = vadd.f32 %v629, 1.0
      %v716 = vadd.f32 %v669, 1.0
      %v717 = vadd.f32 %v709, 1.0
      %v718 = vmul.f32 %v374, %v710
      %v719 = vmul.f32 %v375, %v711
      %v720 = vmul.f32 %v376, %v712
      %v721 = vmul.f32 %v377, %v713
      %v722 = vmul.f32 %v378, %v714
      %v723 = vmul.f32 %v379, %v715
      %v724 = vmul.f32 %v380, %v716
      %v725 = vmul.f32 %v381, %v717
      %v726 = vld [vmem:[%s4] sm:$0xf]
      %728 = vset.pattern.permute.xlu0 0
      %729 = vperm.xlu0 %728, %v726
      %v730 = vpop.permute.xlu0 %729
      %vm732 = vcmask 261120
      %v734 = vsel %vm732, %v273, 0
      %736 = vmatpush.msra.mxu0 0.0
      %737 = vmatpush.msra.mxu0 0.0
      %738 = vmatpush.msra.mxu0 0.0
      %739 = vmatpush.msra.mxu0 0.0
      %740 = vmatpush.msra.mxu0 0.0
      %741 = vmatpush.msra.mxu0 0.0
      %742 = vmatpush.msra.mxu0 0.0
      %743 = vmatpush.msra.mxu0 0.0
      %744 = vmatpush.msra.mxu0 0.0
      %745 = vmatpush.msra.mxu0 0.0
      %746 = vmatpush.msra.mxu0 0.0
      %747 = vmatpush.msra.mxu0 0.0
      %748 = vmatpush.msra.mxu0 %v724
      %749 = vmatpush.msra.mxu0 %v722
      %750 = vmatpush.msra.mxu0 %v720
      %751 = vmatpush.msra.mxu0 %v718
      %752 = vmatmul.f32.gmra.mxu0 %v734
      %v753 = vpop.f32.mrf.mxu0
      %v754 = vadd.f32 %v730, %v753
      %755 = vdwg.mxu0
      %756 = vmatpush.msra.mxu0 0.0
      %757 = vmatpush.msra.mxu0 0.0
      %758 = vmatpush.msra.mxu0 0.0
      %759 = vmatpush.msra.mxu0 0.0
      %760 = vmatpush.msra.mxu0 0.0
      %761 = vmatpush.msra.mxu0 0.0
      %762 = vmatpush.msra.mxu0 0.0
      %763 = vmatpush.msra.mxu0 0.0
      %764 = vmatpush.msra.mxu0 0.0
      %765 = vmatpush.msra.mxu0 0.0
      %766 = vmatpush.msra.mxu0 0.0
      %767 = vmatpush.msra.mxu0 0.0
      %768 = vmatpush.msra.mxu0 %v725
      %769 = vmatpush.msra.mxu0 %v723
      %770 = vmatpush.msra.mxu0 %v721
      %771 = vmatpush.msra.mxu0 %v719
      %772 = vmatmul.f32.gmra.mxu0 %v734
      %v773 = vpop.f32.mrf.mxu0
      %v774 = vadd.f32 %v730, %v773
      %775 = vdwg.mxu0
      %v778 = vrot.slane %v774, 4
      %v779 = vsel %vm311, %v754, %v778
      %781 = vst [vmem:[%s262] sm:$0xff] %v779
      %s782 = smul.u32 2, %s21
      %p783 = scmp.lt.s32.totalorder %s20, 1
      %s784 = scalar_select %p783, %s20, 1
      %p785 = scmp.lt.s32.totalorder %s782, 1
      %s786 = scalar_select %p785, %s782, 1
      %s787 = smul.addr %s784, 2
      %s788 = sadd.s32 %s786, %s787
      %s789 = smul.addr %s788, 4
      %s790 = scalar_lea.vmem %s5, %s789
      // Predicated region
      $region41: #{cmlp_forward.1} parent=39 // pred_check
        %p791 = pneg %p160
      $region42: #{cmlp_forward.1} parent=39 // pred_check_branch
        %793 = sbr.rel (%p791) target = $region44
      $region43: #{cmlp_forward.1} parent=39 // pred_region
        %s794 = smul.u32 2, %s21
      $region44: #{cmlp_forward.1} parent=39 // pred_fallthru
        _
    $region40: #{cmlp_forward.1} parent=5 // pred_fallthru
      _
    %p795 = scmp.le.s32.totalorder 2, %s11
    // Predicated region
    $region45: #{cmlp_forward.1} parent=5 // pred_check
      %p796 = pneg %p795
    $region46: #{cmlp_forward.1} parent=5 // pred_check_branch
      %798 = sbr.rel (%p796) target = $region48
    $region47: #{cmlp_forward.1} parent=5 // pred_region
      %s799 = ssub.s32 %s11, 2
      // Predicated region
      $region49: #{cmlp_forward.1} parent=47 // pred_check
        %p800 = pneg %p166
      $region50: #{cmlp_forward.1} parent=47 // pred_check_branch
        %802 = sbr.rel (%p800) target = $region52
      $region51: #{cmlp_forward.1} parent=47 // pred_region
        %s803 = smul.u32 2, %s23
        %p804 = scmp.lt.s32.totalorder %s22, 1
        %s805 = scalar_select %p804, %s22, 1
        %p806 = scmp.lt.s32.totalorder %s803, 1
        %s807 = scalar_select %p806, %s803, 1
        %s808 = smul.addr %s805, 2
        %s809 = sadd.s32 %s807, %s808
        %s810 = smul.addr %s809, 4
        %s811 = scalar_lea.vmem %s5, %s810
      $region52: #{cmlp_forward.1} parent=47 // pred_fallthru
        _
    $region48: #{cmlp_forward.1} parent=5 // pred_fallthru
      _
  $region6: #{cmlp_forward.1} parent=0 // loop_footer
    %s15 = sadd.s32 1, %s11
  $region7: #{cmlp_forward.1} parent=0 // loop_footer_branch
    %10 = sbr.rel target = $region3
  $region8: #{cmlp_forward.1} parent=0 // loop_exit
    _

</llo_original>
